<compile_context>
chip_gen: v5e
topology: v5e:2x2
jax: 0.10.0
libtpu: 0.0.40
codegen_flags: <defaults>
</compile_context>

<pallas_src>
import functools

import jax
import jax.numpy as jnp
from jax.experimental import pallas as pl
from jax.experimental.pallas import tpu as pltpu


def _round_up(x: int, m: int) -> int:
    return pl.cdiv(x, m) * m


def _choose_tile(batch: int) -> int:
    """Single grid step for small batches; 256-row tiles for large batches."""
    b8 = _round_up(batch, 8)
    return b8 if b8 <= 256 else 256


def dan_kernel(avg_ref, w1_ref, b1_ref, w2_ref, b2_ref, out_ref):
    """Fused MLP head: two bf16 MXU matmuls (f32 accumulation) + bias + ReLU."""
    h = jnp.dot(avg_ref[...].astype(jnp.bfloat16), w1_ref[...],
                preferred_element_type=jnp.float32) + b1_ref[...]       # (TB, Hp)
    h = jnp.maximum(h, 0.0)                                             # ReLU
    out_ref[...] = jnp.dot(h.astype(jnp.bfloat16), w2_ref[...],
                           preferred_element_type=jnp.float32) + b2_ref[...]


def prepare_params(params):
    """One-time (outside the hot path) pad-to-128-lanes + bf16 cast of weights."""
    emb_table, w1, b1, w2, b2 = params
    V, E = emb_table.shape
    H = w1.shape[1]
    C = w2.shape[1]
    Ep, Hp, Cp = _round_up(E, 128), _round_up(H, 128), _round_up(C, 128)

    emb_p = jnp.zeros((V, Ep), jnp.float32).at[:, :E].set(emb_table.astype(jnp.float32))
    emb_p = emb_p.at[0].set(0.0)  # enforce padding_idx=0 row is exactly zero
    w1_p = jnp.zeros((Ep, Hp), jnp.bfloat16).at[:E, :H].set(w1.astype(jnp.bfloat16))
    b1_p = jnp.zeros((1, Hp), jnp.float32).at[:, :H].set(b1.reshape(1, H).astype(jnp.float32))
    w2_p = jnp.zeros((Hp, Cp), jnp.bfloat16).at[:H, :C].set(w2.astype(jnp.bfloat16))
    b2_p = jnp.zeros((1, Cp), jnp.float32).at[:, :C].set(b2.reshape(1, C).astype(jnp.float32))

    prepared = (emb_p, w1_p, b1_p, w2_p, b2_p)
    return jax.tree_util.tree_map(jax.block_until_ready, prepared), C


def _vmem_limit_bytes(tb, Ep, Hp, Cp):
    """Size-derived scoped-VMEM request (double-buffered tiles + headroom)."""
    act = 2 * tb * Ep * 4                      # avg input, 2 buffers, f32
    wts = 2 * (Ep * Hp + Hp * Cp) * 2          # bf16 weights, 2 buffers
    bias = 2 * (Hp + Cp) * 4                   # f32 biases, 2 buffers
    out = 2 * tb * Cp * 4                      # f32 output, 2 buffers
    need = act + wts + bias + out
    return int(min(max(4 * need + (1 << 20), 4 << 20), 64 << 20))


@functools.partial(jax.jit, static_argnames=("tb",))
def _dan_forward_jit(input_text, text_len, emb_p, w1_p, b1_p, w2_p, b2_p, *, tb):
    B = input_text.shape[0]
    Ep = emb_p.shape[1]
    Hp = w1_p.shape[1]
    Cp = w2_p.shape[1]

    # Embedding gather + sequence sum + exact divide-by-length, all fused by XLA.
    # The kernel only ever sees the (B, Ep) averaged representation.
    summed = jnp.take(emb_p, input_text, axis=0).sum(axis=1)            # (B, Ep) f32
    lens = jnp.maximum(text_len.astype(jnp.float32), 1.0)[:, None]      # guard len==0
    avg = summed / lens

    Bp = _round_up(B, tb)
    if Bp != B:
        avg = jnp.zeros((Bp, Ep), jnp.float32).at[:B].set(avg)

    grid = (Bp // tb,)
    flops = 2 * Bp * (Ep * Hp + Hp * Cp)
    bytes_accessed = (4 * (Bp * Ep + Bp * Cp)       # f32 activations in/out
                      + 2 * (Ep * Hp + Hp * Cp)     # bf16 weights
                      + 4 * (Hp + Cp))              # f32 biases

    out_p = pl.pallas_call(
        dan_kernel,
        out_shape=jax.ShapeDtypeStruct((Bp, Cp), jnp.float32),
        grid_spec=pltpu.PrefetchScalarGridSpec(
            num_scalar_prefetch=0,
            grid=grid,
            in_specs=[
                pl.BlockSpec((tb, Ep), lambda i: (i, 0)),   # averaged embeddings
                pl.BlockSpec((Ep, Hp), lambda i: (0, 0)),   # W1 bf16 (resident)
                pl.BlockSpec((1, Hp),  lambda i: (0, 0)),   # b1
                pl.BlockSpec((Hp, Cp), lambda i: (0, 0)),   # W2 bf16 (resident)
                pl.BlockSpec((1, Cp),  lambda i: (0, 0)),   # b2
            ],
            out_specs=pl.BlockSpec((tb, Cp), lambda i: (i, 0)),
        ),
        compiler_params=pltpu.CompilerParams(
            dimension_semantics=("parallel",),
            vmem_limit_bytes=_vmem_limit_bytes(tb, Ep, Hp, Cp),
        ),
        cost_estimate=pl.CostEstimate(
            flops=flops, transcendentals=0, bytes_accessed=bytes_accessed),
    )(avg, w1_p, b1_p, w2_p, b2_p)

    return out_p[:B]                                # (B, Cp); class slice outside


def dan_forward(input_text, text_len, prepared, n_classes, *, tb=None):
    """Public forward: prepared = output of prepare_params(params)."""
    B = input_text.shape[0]
    if tb is None:
        tb = _choose_tile(B)
    emb_p, w1_p, b1_p, w2_p, b2_p = prepared
    out = _dan_forward_jit(input_text, text_len, emb_p, w1_p, b1_p, w2_p, b2_p, tb=tb)
    return out[:, :n_classes]


def dan_reference(input_text, text_len, params):
    """Pure-JAX f32 reference of the same DAN forward."""
    emb_table, w1, b1, w2, b2 = params
    emb = jnp.take(emb_table, input_text, axis=0)
    lens = jnp.maximum(text_len.astype(jnp.float32), 1.0).reshape(-1, 1)
    avg = emb.sum(axis=1) / lens
    h = jnp.maximum(avg @ w1 + b1, 0.0)
    return h @ w2 + b2


def init_params(key, vocab_size, emb_dim, n_hidden, n_classes):
    k_emb, k_w1, k_b1, k_w2, k_b2 = jax.random.split(key, 5)
    emb_table = 0.1 * jax.random.normal(k_emb, (vocab_size, emb_dim), jnp.float32)
    emb_table = emb_table.at[0].set(0.0)               # padding_idx=0
    w1 = 0.1 * jax.random.normal(k_w1, (emb_dim, n_hidden), jnp.float32)
    b1 = 0.1 * jax.random.normal(k_b1, (n_hidden,), jnp.float32)
    w2 = 0.1 * jax.random.normal(k_w2, (n_hidden, n_classes), jnp.float32)
    b2 = 0.1 * jax.random.normal(k_b2, (n_classes,), jnp.float32)
    return (emb_table, w1, b1, w2, b2)


if __name__ == "__main__":
    # Small shapes consistent with the module defaults (emb_dim=50, hidden=50).
    VOCAB, EMB, HID, NCLS = 100, 50, 50, 10
    B, S = 64, 12

    key = jax.random.PRNGKey(0)
    k_par, k_tok, k_len = jax.random.split(key, 3)

    params = init_params(k_par, VOCAB, EMB, HID, NCLS)
    prepared, n_classes = prepare_params(params)        # one-time pad/cast, cached

    # Token ids in [1, VOCAB); pad positions >= text_len with padding index 0.
    text_len = jax.random.randint(k_len, (B,), minval=3, maxval=S + 1,
                                  dtype=jnp.int32)
    tokens = jax.random.randint(k_tok, (B, S), minval=1, maxval=VOCAB,
                                dtype=jnp.int32)
    pos = jnp.arange(S)[None, :]
    input_text = jnp.where(pos < text_len[:, None], tokens, 0)

    out = dan_forward(input_text, text_len, prepared, n_classes)
    out = jax.block_until_ready(out)

    ref = dan_reference(input_text, text_len, params)
    assert out.shape == (B, NCLS)
    # bf16 matmul operands (f32 accumulation, exact length divide) vs f32 ref.
    assert jnp.allclose(out, ref, atol=2e-2, rtol=2e-2), "mismatch vs reference"

    print("KERNEL_OK")
</pallas_src>

<mosaic_0001>
module attributes {stable_mosaic.version = 11 : i64} {
  func.func @dan_kernel(%arg0: i32, %arg1: memref<64x128xf32, #tpu.memory_space<vmem>>, %arg2: memref<128x128xbf16, #tpu.memory_space<vmem>>, %arg3: memref<1x128xf32, #tpu.memory_space<vmem>>, %arg4: memref<128x128xbf16, #tpu.memory_space<vmem>>, %arg5: memref<1x128xf32, #tpu.memory_space<vmem>>, %arg6: memref<64x128xf32, #tpu.memory_space<vmem>>) attributes {dimension_semantics = [#tpu.dimension_semantics<parallel>], iteration_bounds = array<i64: 1>, scalar_prefetch = 0 : i64, scratch_operands = 0 : i64, tpu.core_type = #tpu.core_type<tc>, window_params = [{transform_indices = @transform_0, window_bounds = array<i64: 64, 128>}, {pipeline_mode = #tpu.pipeline_mode<synchronous>, transform_indices = @transform_1, window_bounds = array<i64: 128, 128>}, {pipeline_mode = #tpu.pipeline_mode<synchronous>, transform_indices = @transform_2, window_bounds = array<i64: 1, 128>}, {pipeline_mode = #tpu.pipeline_mode<synchronous>, transform_indices = @transform_3, window_bounds = array<i64: 128, 128>}, {pipeline_mode = #tpu.pipeline_mode<synchronous>, transform_indices = @transform_4, window_bounds = array<i64: 1, 128>}, {transform_indices = @transform_5, window_bounds = array<i64: 64, 128>}]} {
    %c0 = arith.constant 0 : index
    %c0_0 = arith.constant 0 : index
    %0 = vector.load %arg1[%c0, %c0_0] : memref<64x128xf32, #tpu.memory_space<vmem>>, vector<64x128xf32>
    %1 = arith.truncf %0 : vector<64x128xf32> to vector<64x128xbf16>
    %c0_1 = arith.constant 0 : index
    %c0_2 = arith.constant 0 : index
    %2 = vector.load %arg2[%c0_1, %c0_2] : memref<128x128xbf16, #tpu.memory_space<vmem>>, vector<128x128xbf16>
    %cst = arith.constant dense<0.000000e+00> : vector<64x128xf32>
    %3 = tpu.matmul %1, %2, %cst {dimension_numbers = #tpu.dot_dimension_numbers<[1], [0], [0], [1], [0, 0, 1, 1], [], []>} : vector<64x128xbf16>, vector<128x128xbf16>, vector<64x128xf32> -> vector<64x128xf32>
    %c0_3 = arith.constant 0 : index
    %c0_4 = arith.constant 0 : index
    %4 = vector.load %arg3[%c0_3, %c0_4] : memref<1x128xf32, #tpu.memory_space<vmem>>, vector<1x128xf32>
    %5 = vector.broadcast %4 : vector<1x128xf32> to vector<64x128xf32>
    %6 = arith.addf %3, %5 : vector<64x128xf32>
    %cst_5 = arith.constant 0.000000e+00 : f32
    %7 = vector.broadcast %cst_5 : f32 to vector<64x128xf32>
    %8 = arith.maximumf %6, %7 : vector<64x128xf32>
    %9 = arith.truncf %8 : vector<64x128xf32> to vector<64x128xbf16>
    %c0_6 = arith.constant 0 : index
    %c0_7 = arith.constant 0 : index
    %10 = vector.load %arg4[%c0_6, %c0_7] : memref<128x128xbf16, #tpu.memory_space<vmem>>, vector<128x128xbf16>
    %cst_8 = arith.constant dense<0.000000e+00> : vector<64x128xf32>
    %11 = tpu.matmul %9, %10, %cst_8 {dimension_numbers = #tpu.dot_dimension_numbers<[1], [0], [0], [1], [0, 0, 1, 1], [], []>} : vector<64x128xbf16>, vector<128x128xbf16>, vector<64x128xf32> -> vector<64x128xf32>
    %c0_9 = arith.constant 0 : index
    %c0_10 = arith.constant 0 : index
    %12 = vector.load %arg5[%c0_9, %c0_10] : memref<1x128xf32, #tpu.memory_space<vmem>>, vector<1x128xf32>
    %13 = vector.broadcast %12 : vector<1x128xf32> to vector<64x128xf32>
    %14 = arith.addf %11, %13 : vector<64x128xf32>
    %c0_11 = arith.constant 0 : index
    %c0_12 = arith.constant 0 : index
    %15 = vector.load %arg6[%c0_11, %c0_12] : memref<64x128xf32, #tpu.memory_space<vmem>>, vector<64x128xf32>
    tpu.vector_store %arg6[%c0_11, %c0_12], %14 {strides = array<i32>} : memref<64x128xf32, #tpu.memory_space<vmem>>, vector<64x128xf32>,
    return
  }
  func.func @transform_0(%arg0: i32) -> (i32, i32) {
    %c0_i32 = arith.constant 0 : i32
    %c0_i32_0 = arith.constant 0 : i32
    return %arg0, %c0_i32 : i32, i32
  }
  func.func @transform_1(%arg0: i32) -> (i32, i32) {
    %c0_i32 = arith.constant 0 : i32
    %c0_i32_0 = arith.constant 0 : i32
    %c0_i32_1 = arith.constant 0 : i32
    return %c0_i32, %c0_i32_0 : i32, i32
  }
  func.func @transform_2(%arg0: i32) -> (i32, i32) {
    %c0_i32 = arith.constant 0 : i32
    %c0_i32_0 = arith.constant 0 : i32
    %c0_i32_1 = arith.constant 0 : i32
    return %c0_i32, %c0_i32_0 : i32, i32
  }
  func.func @transform_3(%arg0: i32) -> (i32, i32) {
    %c0_i32 = arith.constant 0 : i32
    %c0_i32_0 = arith.constant 0 : i32
    %c0_i32_1 = arith.constant 0 : i32
    return %c0_i32, %c0_i32_0 : i32, i32
  }
  func.func @transform_4(%arg0: i32) -> (i32, i32) {
    %c0_i32 = arith.constant 0 : i32
    %c0_i32_0 = arith.constant 0 : i32
    %c0_i32_1 = arith.constant 0 : i32
    return %c0_i32, %c0_i32_0 : i32, i32
  }
  func.func @transform_5(%arg0: i32) -> (i32, i32) {
    %c0_i32 = arith.constant 0 : i32
    %c0_i32_0 = arith.constant 0 : i32
    return %arg0, %c0_i32 : i32, i32
  }
}

</mosaic_0001>

<llo_original>
// kernel: _dan_forward_jit.1
$region0: #{_dan_forward_jit.1}
  #allocation0 [shape = 'u32[]', space=smem, size = 0x4, offset = 0x4, fixed_abs, tag = 'smem constant byte address 0x4 - core index']
  #allocation1 [shape = 'u32[72,128]{1,0:T(1,128)}', space=vmem, size = 0x9000, scoped, tag = 'internal scratch']
  %s0 = inlined_call_operand.vmem [shape: f32[64,128], index: 0, kind: input, shape index: {}]
  %s1 = inlined_call_operand.vmem [shape: bf16[128,128], index: 1, kind: input, shape index: {}]
  %s2 = inlined_call_operand.vmem [shape: f32[1,128], index: 2, kind: input, shape index: {}]
  %s3 = inlined_call_operand.vmem [shape: bf16[128,128], index: 3, kind: input, shape index: {}]
  %s4 = inlined_call_operand.vmem [shape: f32[1,128], index: 4, kind: input, shape index: {}]
  %s5 = inlined_call_operand.hbm [shape: f32[64,128], index: 5, kind: output, shape index: {}]
  %s6 = sld [smem:[#allocation0]]
  $region30: #{_dan_forward_jit.1} parent=0
    _
  %s8 = ssub.s32 1, %s6
  %s9 = scalar_select 0, %s8, %s6
  $region1: #{_dan_forward_jit.1} parent=0
    #allocation2 [shape = 'u8[32768]{0}', space=vmem, size = 0x8000, scoped, tag = 'output window, operand 0, single buffered']
    #allocation3 [shape = 's32[1]{0}', space=sflag, size = 0x4, scoped, tag = 'scoped memory for _dan_forward_jit.1']
    %10 = vsyncpa [#allocation3], 0
    // Predicated region
    $region2: #{_dan_forward_jit.1} parent=1 // pred_check
      _
    $region3: #{_dan_forward_jit.1} parent=1 // pred_check_branch
      %12 = sbr.rel (0) target = $region5
    $region4: #{_dan_forward_jit.1} parent=1 // pred_region
      _
    $region5: #{_dan_forward_jit.1} parent=1 // pred_fallthru
      _
    // Predicated region
    $region6: #{_dan_forward_jit.1} parent=1 // pred_check
      _
    $region7: #{_dan_forward_jit.1} parent=1 // pred_check_branch
      %14 = sbr.rel (0) target = $region9
    $region8: #{_dan_forward_jit.1} parent=1 // pred_region
      _
    $region9: #{_dan_forward_jit.1} parent=1 // pred_fallthru
      _
    // Predicated region
    $region10: #{_dan_forward_jit.1} parent=1 // pred_check
      _
    $region11: #{_dan_forward_jit.1} parent=1 // pred_check_branch
      %16 = sbr.rel (0) target = $region13
    $region12: #{_dan_forward_jit.1} parent=1 // pred_region
      _
    $region13: #{_dan_forward_jit.1} parent=1 // pred_fallthru
      _
    // Predicated region
    $region14: #{_dan_forward_jit.1} parent=1 // pred_check
      _
    $region15: #{_dan_forward_jit.1} parent=1 // pred_check_branch
      %18 = sbr.rel (0) target = $region17
    $region16: #{_dan_forward_jit.1} parent=1 // pred_region
      _
    $region17: #{_dan_forward_jit.1} parent=1 // pred_fallthru
      _
    // Predicated region
    $region18: #{_dan_forward_jit.1} parent=1 // pred_check
      _
    $region19: #{_dan_forward_jit.1} parent=1 // pred_check_branch
      %20 = sbr.rel (0) target = $region21
    $region20: #{_dan_forward_jit.1} parent=1 // pred_region
      _
    $region21: #{_dan_forward_jit.1} parent=1 // pred_fallthru
      _
    %v21 = vld [vmem:[%s0] sm:$0xff]
    %v22 = vld [vmem:[%s0 + $0x8] sm:$0xff]
    %v23 = vld [vmem:[%s0 + $0x10] sm:$0xff]
    %v24 = vld [vmem:[%s0 + $0x18] sm:$0xff]
    %v25 = vld [vmem:[%s0 + $0x20] sm:$0xff]
    %v26 = vld [vmem:[%s0 + $0x28] sm:$0xff]
    %v27 = vld [vmem:[%s0 + $0x30] sm:$0xff]
    %v28 = vld [vmem:[%s0 + $0x38] sm:$0xff]
    %v29 = vpack.c.bf16 %v22, %v21
    %v30 = vpack.c.bf16 %v24, %v23
    %v31 = vpack.c.bf16 %v26, %v25
    %v32 = vpack.c.bf16 %v28, %v27
    %v33 = vld [vmem:[%s1] sm:$0xf]
    %v34 = vld [vmem:[%s1 + $0x4] sm:$0xf]
    %v35 = vld [vmem:[%s1 + $0x8] sm:$0xf]
    %v36 = vld [vmem:[%s1 + $0xc] sm:$0xf]
    %v37 = vld [vmem:[%s1 + $0x10] sm:$0xf]
    %v38 = vld [vmem:[%s1 + $0x14] sm:$0xf]
    %v39 = vld [vmem:[%s1 + $0x18] sm:$0xf]
    %v40 = vld [vmem:[%s1 + $0x1c] sm:$0xf]
    %v41 = vld [vmem:[%s1 + $0x20] sm:$0xf]
    %v42 = vld [vmem:[%s1 + $0x24] sm:$0xf]
    %v43 = vld [vmem:[%s1 + $0x28] sm:$0xf]
    %v44 = vld [vmem:[%s1 + $0x2c] sm:$0xf]
    %v45 = vld [vmem:[%s1 + $0x30] sm:$0xf]
    %v46 = vld [vmem:[%s1 + $0x34] sm:$0xf]
    %v47 = vld [vmem:[%s1 + $0x38] sm:$0xf]
    %v48 = vld [vmem:[%s1 + $0x3c] sm:$0xf]
    %v49 = vld [vmem:[%s2] sm:$0x1]
    %v51 = vperm.slane %v49, 0
    %v69 = vunpack.c.l.b16 %v33
    %v70 = vunpack.c.l.b16 %v34
    %v71 = vunpack.c.l.b16 %v35
    %v72 = vunpack.c.l.b16 %v36
    %v73 = vunpack.c.l.b16 %v37
    %v74 = vunpack.c.l.b16 %v38
    %v75 = vunpack.c.l.b16 %v39
    %v76 = vunpack.c.l.b16 %v40
    %v77 = vunpack.c.l.b16 %v41
    %v78 = vunpack.c.l.b16 %v42
    %v79 = vunpack.c.l.b16 %v43
    %v80 = vunpack.c.l.b16 %v44
    %v81 = vunpack.c.l.b16 %v45
    %v82 = vunpack.c.l.b16 %v46
    %v83 = vunpack.c.l.b16 %v47
    %v84 = vunpack.c.l.b16 %v48
    %v85 = vpack.c.b16 %v70, %v69
    %v86 = vpack.c.b16 %v72, %v71
    %v87 = vpack.c.b16 %v74, %v73
    %v88 = vpack.c.b16 %v76, %v75
    %v89 = vpack.c.b16 %v78, %v77
    %v90 = vpack.c.b16 %v80, %v79
    %v91 = vpack.c.b16 %v82, %v81
    %v92 = vpack.c.b16 %v84, %v83
    %101 = vmatpush.bf16.msra.mxu0 %v92
    %102 = vmatpush.bf16.msra.mxu0 %v91
    %103 = vmatpush.bf16.msra.mxu0 %v90
    %104 = vmatpush.bf16.msra.mxu0 %v89
    %105 = vmatpush.bf16.msra.mxu0 %v88
    %106 = vmatpush.bf16.msra.mxu0 %v87
    %107 = vmatpush.bf16.msra.mxu0 %v86
    %108 = vmatpush.bf16.msra.mxu0 %v85
    %109 = vmatmul.bf16.gmra.mxu0 %v29
    %v110 = vpop.f32.mrf.mxu0
    %v111 = vadd.f32 %v51, %v110
    %v112 = vpop.f32.mrf.mxu0
    %v113 = vadd.f32 %v51, %v112
    %114 = vmatmul.bf16.gmra.mxu0 %v30
    %v115 = vpop.f32.mrf.mxu0
    %v116 = vadd.f32 %v51, %v115
    %v117 = vpop.f32.mrf.mxu0
    %v118 = vadd.f32 %v51, %v117
    %119 = vmatmul.bf16.gmra.mxu0 %v31
    %v120 = vpop.f32.mrf.mxu0
    %v121 = vadd.f32 %v51, %v120
    %v122 = vpop.f32.mrf.mxu0
    %v123 = vadd.f32 %v51, %v122
    %124 = vmatmul.bf16.gmra.mxu0 %v32
    %v125 = vpop.f32.mrf.mxu0
    %v126 = vadd.f32 %v51, %v125
    %v127 = vpop.f32.mrf.mxu0
    %v128 = vadd.f32 %v51, %v127
    %129 = vdwg.mxu0
    %v130 = vmax.f32 %v111, 0.0
    %v131 = vmax.f32 %v113, 0.0
    %v132 = vmax.f32 %v116, 0.0
    %v133 = vmax.f32 %v118, 0.0
    %v134 = vmax.f32 %v121, 0.0
    %v135 = vmax.f32 %v123, 0.0
    %v136 = vmax.f32 %v126, 0.0
    %v137 = vmax.f32 %v128, 0.0
    %v138 = vpack.c.bf16 %v131, %v130
    %v139 = vpack.c.bf16 %v133, %v132
    %v140 = vpack.c.bf16 %v135, %v134
    %v141 = vpack.c.bf16 %v137, %v136
    %v142 = vld [vmem:[%s3] sm:$0xf]
    %v143 = vld [vmem:[%s3 + $0x4] sm:$0xf]
    %v144 = vld [vmem:[%s3 + $0x8] sm:$0xf]
    %v145 = vld [vmem:[%s3 + $0xc] sm:$0xf]
    %v146 = vld [vmem:[%s3 + $0x10] sm:$0xf]
    %v147 = vld [vmem:[%s3 + $0x14] sm:$0xf]
    %v148 = vld [vmem:[%s3 + $0x18] sm:$0xf]
    %v149 = vld [vmem:[%s3 + $0x1c] sm:$0xf]
    %v150 = vld [vmem:[%s3 + $0x20] sm:$0xf]
    %v151 = vld [vmem:[%s3 + $0x24] sm:$0xf]
    %v152 = vld [vmem:[%s3 + $0x28] sm:$0xf]
    %v153 = vld [vmem:[%s3 + $0x2c] sm:$0xf]
    %v154 = vld [vmem:[%s3 + $0x30] sm:$0xf]
    %v155 = vld [vmem:[%s3 + $0x34] sm:$0xf]
    %v156 = vld [vmem:[%s3 + $0x38] sm:$0xf]
    %v157 = vld [vmem:[%s3 + $0x3c] sm:$0xf]
    %v158 = vld [vmem:[%s4] sm:$0x1]
    %v160 = vperm.slane %v158, 0
    %v178 = vunpack.c.l.b16 %v142
    %v179 = vunpack.c.l.b16 %v143
    %v180 = vunpack.c.l.b16 %v144
    %v181 = vunpack.c.l.b16 %v145
    %v182 = vunpack.c.l.b16 %v146
    %v183 = vunpack.c.l.b16 %v147
    %v184 = vunpack.c.l.b16 %v148
    %v185 = vunpack.c.l.b16 %v149
    %v186 = vunpack.c.l.b16 %v150
    %v187 = vunpack.c.l.b16 %v151
    %v188 = vunpack.c.l.b16 %v152
    %v189 = vunpack.c.l.b16 %v153
    %v190 = vunpack.c.l.b16 %v154
    %v191 = vunpack.c.l.b16 %v155
    %v192 = vunpack.c.l.b16 %v156
    %v193 = vunpack.c.l.b16 %v157
    %v194 = vpack.c.b16 %v179, %v178
    %v195 = vpack.c.b16 %v181, %v180
    %v196 = vpack.c.b16 %v183, %v182
    %v197 = vpack.c.b16 %v185, %v184
    %v198 = vpack.c.b16 %v187, %v186
    %v199 = vpack.c.b16 %v189, %v188
    %v200 = vpack.c.b16 %v191, %v190
    %v201 = vpack.c.b16 %v193, %v192
    %210 = vmatpush.bf16.msra.mxu0 %v201
    %211 = vmatpush.bf16.msra.mxu0 %v200
    %212 = vmatpush.bf16.msra.mxu0 %v199
    %213 = vmatpush.bf16.msra.mxu0 %v198
    %214 = vmatpush.bf16.msra.mxu0 %v197
    %215 = vmatpush.bf16.msra.mxu0 %v196
    %216 = vmatpush.bf16.msra.mxu0 %v195
    %217 = vmatpush.bf16.msra.mxu0 %v194
    %218 = vmatmul.bf16.gmra.mxu0 %v138
    %v219 = vpop.f32.mrf.mxu0
    %v220 = vadd.f32 %v160, %v219
    %v221 = vpop.f32.mrf.mxu0
    %v222 = vadd.f32 %v160, %v221
    %223 = vmatmul.bf16.gmra.mxu0 %v139
    %v224 = vpop.f32.mrf.mxu0
    %v225 = vadd.f32 %v160, %v224
    %v226 = vpop.f32.mrf.mxu0
    %v227 = vadd.f32 %v160, %v226
    %228 = vmatmul.bf16.gmra.mxu0 %v140
    %v229 = vpop.f32.mrf.mxu0
    %v230 = vadd.f32 %v160, %v229
    %v231 = vpop.f32.mrf.mxu0
    %v232 = vadd.f32 %v160, %v231
    %233 = vmatmul.bf16.gmra.mxu0 %v141
    %v234 = vpop.f32.mrf.mxu0
    %v235 = vadd.f32 %v160, %v234
    %v236 = vpop.f32.mrf.mxu0
    %v237 = vadd.f32 %v160, %v236
    %238 = vdwg.mxu0
    %239 = vst [vmem:[#allocation2] sm:$0xff] %v220
    %240 = vst [vmem:[#allocation2 + $0x8] sm:$0xff] %v222
    %241 = vst [vmem:[#allocation2 + $0x10] sm:$0xff] %v225
    %242 = vst [vmem:[#allocation2 + $0x18] sm:$0xff] %v227
    %243 = vst [vmem:[#allocation2 + $0x20] sm:$0xff] %v230
    %244 = vst [vmem:[#allocation2 + $0x28] sm:$0xff] %v232
    %245 = vst [vmem:[#allocation2 + $0x30] sm:$0xff] %v235
    %246 = vst [vmem:[#allocation2 + $0x38] sm:$0xff] %v237
    // Predicated region
    $region22: #{_dan_forward_jit.1} parent=1 // pred_check
      _
    $region23: #{_dan_forward_jit.1} parent=1 // pred_check_branch
      %248 = sbr.rel (0) target = $region25
    $region24: #{_dan_forward_jit.1} parent=1 // pred_region
      %250 = vsyncadd [#allocation3], 0
      %s251 = sshll.u32 [#allocation2], 4
      %s252 = int_to_ptr.vmem [resolvable:$true] %s251
      %s253 = sshll.u32 %s5, 4
      %s254 = int_to_ptr.hbm [resolvable:$true] %s253
      %259 = dma.vmem_to_hbm [thread:$0]  %s252, 1024, %s254, [#allocation3], 128, 128, 8
    $region25: #{_dan_forward_jit.1} parent=1 // pred_fallthru
      _
    // Predicated region
    $region26: #{_dan_forward_jit.1} parent=1 // pred_check
      _
    $region27: #{_dan_forward_jit.1} parent=1 // pred_check_branch
      %261 = sbr.rel (0) target = $region29
    $region28: #{_dan_forward_jit.1} parent=1 // pred_region
      %263 = dma.done [#allocation3], 1024
    $region29: #{_dan_forward_jit.1} parent=1 // pred_fallthru
      _
    %264 = vsyncpa [#allocation3], 1

</llo_original>
